<compile_context>
chip_gen: v7x
topology: tpu7x:2x2x1
jax: 0.10.0
libtpu: 0.0.40
codegen_flags: <defaults>
</compile_context>

<pallas_src>
import numpy as np
import jax
import jax.numpy as jnp
from jax.experimental import pallas as pl
from jax.experimental.pallas import tpu as pltpu

LEAKY_SLOPE = 0.2


# --------------------------------------------------------------------------------------
# Host-side one-time weight repacking: fold the 3x3 kernels + column relations into three
# merged band matrices acting on lane-packed rows (lane index = column*C + channel).
# --------------------------------------------------------------------------------------
def pack_params(params, H, W, compute_dtype=jnp.bfloat16):
    C = int(params["bt"].shape[0])
    Wu = 2 * W                       # upsampled width
    L, L2 = W * C, Wu * C            # lanes per low-res / hi-res row

    # ConvTranspose2d(k=3, s=2, p=1, op=1) column relation:  ow = 2*iw - 1 + kw
    R = np.zeros((W, Wu, 3), np.float32)
    for iw in range(W):
        for kw in range(3):
            ow = 2 * iw - 1 + kw
            if 0 <= ow < Wu:
                R[iw, ow, kw] = 1.0
    # Conv2d(k=3, s=1, p=1) column relation:  v(in) = u(out) + kw - 1
    P = np.zeros((Wu, Wu, 3), np.float32)
    for u in range(Wu):
        for kw in range(3):
            v = u + kw - 1
            if 0 <= v < Wu:
                P[v, u, kw] = 1.0
    # Conv2d(k=3, s=2, p=1) column relation:  v(in) = 2*w(out) + kw - 1
    Q = np.zeros((Wu, W, 3), np.float32)
    for w in range(W):
        for kw in range(3):
            v = 2 * w + kw - 1
            if 0 <= v < Wu:
                Q[v, w, kw] = 1.0

    wt = np.asarray(params["wt"], np.float32)   # ConvTranspose2d weight: (Cin, Cout, kH, kW)
    wy = np.asarray(params["w_y"], np.float32)  # Conv2d weight:          (Cout, Cin, kH, kW)
    wn = np.asarray(params["w_n"], np.float32)

    # Deconv sub-pixel split: even X1 rows <- kh=1 taps of input row a;
    # odd X1 rows <- kh=2 taps of row a + kh=0 taps of row a+1.
    B_e  = np.einsum("wok,cdk->wcod", R, wt[:, :, 1, :]).reshape(L, L2)
    B_o0 = np.einsum("wok,cdk->wcod", R, wt[:, :, 0, :]).reshape(L, L2)
    B_o2 = np.einsum("wok,cdk->wcod", R, wt[:, :, 2, :]).reshape(L, L2)
    A  = [np.einsum("vuk,dck->vcud", P, wy[:, :, kh, :]).reshape(L2, L2) for kh in range(3)]
    Cm = [np.einsum("vwk,dck->vcwd", Q, wn[:, :, kh, :]).reshape(L2, L) for kh in range(3)]

    # Merged RHS matrices (taps concatenated on K; stage-1 also concatenated on N).
    W1 = np.block([[B_o2, B_e],
                   [B_o0, np.zeros_like(B_e)]])       # (2L, 2*L2): [x | x_up] -> [odd | even]
    W2 = np.concatenate(A, axis=0)                    # (3*L2, L2)
    W3 = np.concatenate(Cm, axis=0)                   # (3*L2, L)

    return {
        "W1": jnp.asarray(W1, compute_dtype),
        "W2": jnp.asarray(W2, compute_dtype),
        "W3": jnp.asarray(W3, compute_dtype),
        "b1": jnp.asarray(np.tile(np.asarray(params["bt"], np.float32), 2 * Wu)[None, :]),
        "b2": jnp.asarray(np.tile(np.asarray(params["b_y"], np.float32), Wu)[None, :]),
        "b3": jnp.asarray(np.tile(np.asarray(params["b_n"], np.float32), W)[None, :]),
    }


# --------------------------------------------------------------------------------------
# Fused kernel: one grid step = Nb images (M = Nb*H rows), everything resident on-chip.
# --------------------------------------------------------------------------------------
def _make_kernel(M, L2):
    def kernel(x_ref, w1_ref, w2_ref, w3_ref, b1_ref, b2_ref, b3_ref,
               nf_ref, nl_ref, o_ref):
        f32 = jnp.float32
        w1, w2, w3 = w1_ref[...], w2_ref[...], w3_ref[...]
        cdt = w1.dtype                                  # MXU operand dtype (bf16 or f32)
        lrelu = lambda v: jnp.where(v > 0, v, LEAKY_SLOPE * v)
        mm = lambda a, b: jnp.dot(a.astype(cdt), b, preferred_element_type=f32)

        x = x_ref[...]                                  # (M, W*C) f32, M = Nb*H rows
        not_first = nf_ref[...]                         # (M, 1): 0 on first row of each image
        not_last = nl_ref[...]                          # (M, 1): 0 on last  row of each image

        # In-register +/-1 spatial-row shifts with zero boundary rows (XLU roll + VPU mask);
        # replaces the old VMEM-scratch store / unaligned-reload round trips.
        shift_dn = lambda v: pltpu.roll(v, 1, 0) * not_first        # out[r] = v[r-1]
        shift_up = lambda v: pltpu.roll(v, M - 1, 0) * not_last     # out[r] = v[r+1]

        # ---- Stage 1: X1 = LeakyReLU(ConvTranspose2d(x)), sub-pixel (row-parity) split.
        lhs1 = jnp.concatenate([x, shift_up(x)], axis=1)            # (M, 2*W*C)
        x1 = lrelu(mm(lhs1, w1) + b1_ref[...])                      # (M, 2*L2) = [odd | even]
        x1_odd, x1_even = x1[:, :L2], x1[:, L2:]

        # ---- Stage 2: Y1 = LeakyReLU(Conv2d s1 (X1)) + X1; parities stacked on M, taps on K.
        lhs2 = jnp.concatenate(
            [jnp.concatenate([shift_dn(x1_odd), x1_even, x1_odd], axis=1),    # even Y1 rows
             jnp.concatenate([x1_even, x1_odd, shift_up(x1_even)], axis=1)],  # odd  Y1 rows
            axis=0)                                                 # (2M, 3*L2)
        z2 = lrelu(mm(lhs2, w2) + b2_ref[...])                      # (2M, L2)
        y1_even = z2[:M] + x1_even
        y1_odd = z2[M:] + x1_odd

        # ---- Stage 3: out = LeakyReLU(Conv2d s2 (Y1)) + x.
        lhs3 = jnp.concatenate([shift_dn(y1_odd), y1_even, y1_odd], axis=1)   # (M, 3*L2)
        z3 = lrelu(mm(lhs3, w3) + b3_ref[...])                      # (M, W*C)
        o_ref[...] = (z3 + x).astype(o_ref.dtype)

    return kernel


def _pick_images_per_step(N, H):
    """Grow M = Nb*H toward ~256 MXU rows, but keep >= 2 grid steps when N >= 2 so the
    'parallel' grid axis can shard over v7x's 2 TensorCores."""
    target = max(1, 256 // max(H, 1))
    best = 1
    for nb in range(1, N + 1):
        if N % nb or nb > target:
            continue
        if N >= 2 and N // nb < 2:
            continue
        best = nb
    return best


def up_res_cnn_fused(xp, packed, not_first, not_last):
    NH, L = xp.shape
    M = int(not_first.shape[0])
    G = NH // M
    L2 = int(packed["W2"].shape[1])
    kernel = _make_kernel(M, L2)

    const2d = lambda arr: pl.BlockSpec(arr.shape, lambda i: (0, 0))
    return pl.pallas_call(
        kernel,
        out_shape=jax.ShapeDtypeStruct((NH, L), xp.dtype),
        grid=(G,),
        in_specs=[
            pl.BlockSpec((M, L), lambda i: (i, 0)),
            const2d(packed["W1"]),
            const2d(packed["W2"]),
            const2d(packed["W3"]),
            const2d(packed["b1"]),
            const2d(packed["b2"]),
            const2d(packed["b3"]),
            const2d(not_first),
            const2d(not_last),
        ],
        out_specs=pl.BlockSpec((M, L), lambda i: (i, 0)),
        compiler_params=pltpu.CompilerParams(dimension_semantics=("parallel",)),
    )(xp, packed["W1"], packed["W2"], packed["W3"],
      packed["b1"], packed["b2"], packed["b3"], not_first, not_last)


def up_res_cnn_forward(x_nchw, packed, images_per_step=None):
    """x_nchw: (N, C, H, W) float32 (PyTorch layout). Returns (N, C, H, W)."""
    N, C, H, W = x_nchw.shape
    L = W * C
    nb = _pick_images_per_step(N, H) if images_per_step is None else images_per_step
    assert N % nb == 0
    M = nb * H
    # Lane-packed rows (lane = column*C + channel), images flattened along the row axis.
    xp = jnp.transpose(x_nchw, (0, 2, 3, 1)).reshape(N * H, L)
    # 0/1 boundary masks for the per-image +/-1 row shifts (trace-time constants).
    r = np.arange(M) % H
    not_first = jnp.asarray((r != 0).astype(np.float32)[:, None])
    not_last = jnp.asarray((r != H - 1).astype(np.float32)[:, None])
    out = up_res_cnn_fused(xp, packed, not_first, not_last)
    return jnp.transpose(out.reshape(N, H, W, C), (0, 3, 1, 2))


# --------------------------------------------------------------------------------------
# Pure numpy reference (PyTorch semantics, NHWC) for verification
# --------------------------------------------------------------------------------------
def ref_forward_np(x, params):
    x = np.asarray(x, np.float64)
    N, H, W, C = x.shape
    lrelu = lambda v: np.where(v > 0, v, 0.2 * v)

    # ConvTranspose2d(k=3, s=2, p=1, op=1):  oh = 2*ih - 1 + kh
    wt = np.asarray(params["wt"], np.float64)       # (Cin, Cout, 3, 3)
    x1 = np.zeros((N, 2 * H, 2 * W, C))
    for kh in range(3):
        ih = np.arange(H); oh = 2 * ih - 1 + kh
        mh = (oh >= 0) & (oh < 2 * H)
        for kw in range(3):
            iw = np.arange(W); ow = 2 * iw - 1 + kw
            mw = (ow >= 0) & (ow < 2 * W)
            contrib = np.einsum("nhwc,cd->nhwd", x[:, ih[mh]][:, :, iw[mw]], wt[:, :, kh, kw])
            x1[np.ix_(np.arange(N), oh[mh], ow[mw], np.arange(C))] += contrib
    x1 = lrelu(x1 + np.asarray(params["bt"], np.float64))

    # Conv2d(k=3, s=1, p=1) + LeakyReLU, then + x1
    wy = np.asarray(params["w_y"], np.float64)      # (Cout, Cin, 3, 3)
    xp = np.pad(x1, ((0, 0), (1, 1), (1, 1), (0, 0)))
    y1 = np.zeros_like(x1)
    for kh in range(3):
        for kw in range(3):
            y1 += np.einsum("nhwc,dc->nhwd", xp[:, kh:kh + 2 * H, kw:kw + 2 * W, :], wy[:, :, kh, kw])
    y1 = lrelu(y1 + np.asarray(params["b_y"], np.float64)) + x1

    # Conv2d(k=3, s=2, p=1) + LeakyReLU, then + x
    wn = np.asarray(params["w_n"], np.float64)
    yp = np.pad(y1, ((0, 0), (1, 1), (1, 1), (0, 0)))
    out = np.zeros((N, H, W, C))
    for kh in range(3):
        for kw in range(3):
            out += np.einsum("nhwc,dc->nhwd", yp[:, kh:kh + 2 * H:2, kw:kw + 2 * W:2, :], wn[:, :, kh, kw])
    out = lrelu(out + np.asarray(params["b_n"], np.float64)) + x
    return out


# --------------------------------------------------------------------------------------
if __name__ == "__main__":
    N, C, H, W = 2, 4, 16, 16
    key = jax.random.PRNGKey(0)
    ks = jax.random.split(key, 7)
    # Deterministic synthetic parameters (shapes follow nn.ConvTranspose2d / nn.Conv2d, feat_num=C).
    params = {
        "wt": 0.3 * jax.random.normal(ks[0], (C, C, 3, 3), jnp.float32),   # ConvTranspose2d (Cin, Cout, kH, kW)
        "bt": 0.1 * jax.random.normal(ks[1], (C,), jnp.float32),
        "w_y": 0.3 * jax.random.normal(ks[2], (C, C, 3, 3), jnp.float32),  # Conv2d (Cout, Cin, kH, kW)
        "b_y": 0.1 * jax.random.normal(ks[3], (C,), jnp.float32),
        "w_n": 0.3 * jax.random.normal(ks[4], (C, C, 3, 3), jnp.float32),
        "b_n": 0.1 * jax.random.normal(ks[5], (C,), jnp.float32),
    }
    x_nchw = jax.random.normal(ks[6], (N, C, H, W), jnp.float32)           # PyTorch-style NCHW input

    x_nhwc = np.transpose(np.asarray(x_nchw), (0, 2, 3, 1))
    ref_nhwc = ref_forward_np(x_nhwc, {k: np.asarray(v) for k, v in params.items()})

    fwd = jax.jit(up_res_cnn_forward)

    # (a) f32 weights: tight check of the packing / shift / fusion logic (grid=(2,), Nb=1).
    out32 = jax.block_until_ready(fwd(x_nchw, pack_params(params, H, W, jnp.float32)))
    assert out32.shape == (N, C, H, W)
    o32 = np.transpose(np.asarray(out32), (0, 2, 3, 1))
    err32 = np.max(np.abs(o32 - ref_nhwc))
    assert np.allclose(o32, ref_nhwc, rtol=5e-3, atol=5e-3), f"f32 max abs err {err32}"

    # (b) f32 weights, both images batched into one grid step (Nb=2): exercises the
    #     flattened multi-image row-boundary masks.
    fwd_nb2 = jax.jit(lambda xx, pp: up_res_cnn_forward(xx, pp, images_per_step=2))
    out32b = jax.block_until_ready(fwd_nb2(x_nchw, pack_params(params, H, W, jnp.float32)))
    o32b = np.transpose(np.asarray(out32b), (0, 2, 3, 1))
    err32b = np.max(np.abs(o32b - ref_nhwc))
    assert np.allclose(o32b, ref_nhwc, rtol=5e-3, atol=5e-3), f"f32 (Nb=2) max abs err {err32b}"

    # (c) bf16 weights/activations on the MXU (fast path): scale-aware tolerance.
    outbf = jax.block_until_ready(fwd(x_nchw, pack_params(params, H, W, jnp.bfloat16)))
    obf = np.transpose(np.asarray(outbf), (0, 2, 3, 1))
    errbf = float(np.max(np.abs(obf - ref_nhwc)))
    scale = float(np.max(np.abs(ref_nhwc)))
    assert errbf <= 3e-2 * scale, f"bf16 max abs err {errbf} vs output scale {scale}"

    print("KERNEL_OK")
</pallas_src>

<mosaic_0001>
module attributes {stable_mosaic.version = 11 : i64} {
  func.func @kernel(%arg0: i32, %arg1: memref<16x64xf32, #tpu.memory_space<vmem>>, %arg2: memref<128x256xf32, #tpu.memory_space<vmem>>, %arg3: memref<384x128xf32, #tpu.memory_space<vmem>>, %arg4: memref<384x64xf32, #tpu.memory_space<vmem>>, %arg5: memref<1x256xf32, #tpu.memory_space<vmem>>, %arg6: memref<1x128xf32, #tpu.memory_space<vmem>>, %arg7: memref<1x64xf32, #tpu.memory_space<vmem>>, %arg8: memref<16x1xf32, #tpu.memory_space<vmem>>, %arg9: memref<16x1xf32, #tpu.memory_space<vmem>>, %arg10: memref<16x64xf32, #tpu.memory_space<vmem>>) attributes {dimension_semantics = [#tpu.dimension_semantics<parallel>], iteration_bounds = array<i64: 2>, scalar_prefetch = 0 : i64, scratch_operands = 0 : i64, tpu.core_type = #tpu.core_type<tc>, window_params = [{transform_indices = @transform_0, window_bounds = array<i64: 16, 64>}, {pipeline_mode = #tpu.pipeline_mode<synchronous>, transform_indices = @transform_1, window_bounds = array<i64: 128, 256>}, {pipeline_mode = #tpu.pipeline_mode<synchronous>, transform_indices = @transform_2, window_bounds = array<i64: 384, 128>}, {pipeline_mode = #tpu.pipeline_mode<synchronous>, transform_indices = @transform_3, window_bounds = array<i64: 384, 64>}, {pipeline_mode = #tpu.pipeline_mode<synchronous>, transform_indices = @transform_4, window_bounds = array<i64: 1, 256>}, {pipeline_mode = #tpu.pipeline_mode<synchronous>, transform_indices = @transform_5, window_bounds = array<i64: 1, 128>}, {pipeline_mode = #tpu.pipeline_mode<synchronous>, transform_indices = @transform_6, window_bounds = array<i64: 1, 64>}, {pipeline_mode = #tpu.pipeline_mode<synchronous>, transform_indices = @transform_7, window_bounds = array<i64: 16, 1>}, {pipeline_mode = #tpu.pipeline_mode<synchronous>, transform_indices = @transform_8, window_bounds = array<i64: 16, 1>}, {transform_indices = @transform_9, window_bounds = array<i64: 16, 64>}]} {
    %c0 = arith.constant 0 : index
    %c0_0 = arith.constant 0 : index
    %0 = vector.load %arg2[%c0, %c0_0] : memref<128x256xf32, #tpu.memory_space<vmem>>, vector<128x256xf32>
    %c0_1 = arith.constant 0 : index
    %c0_2 = arith.constant 0 : index
    %1 = vector.load %arg3[%c0_1, %c0_2] : memref<384x128xf32, #tpu.memory_space<vmem>>, vector<384x128xf32>
    %c0_3 = arith.constant 0 : index
    %c0_4 = arith.constant 0 : index
    %2 = vector.load %arg4[%c0_3, %c0_4] : memref<384x64xf32, #tpu.memory_space<vmem>>, vector<384x64xf32>
    %c0_5 = arith.constant 0 : index
    %c0_6 = arith.constant 0 : index
    %3 = vector.load %arg1[%c0_5, %c0_6] : memref<16x64xf32, #tpu.memory_space<vmem>>, vector<16x64xf32>
    %c0_7 = arith.constant 0 : index
    %c0_8 = arith.constant 0 : index
    %4 = vector.load %arg8[%c0_7, %c0_8] : memref<16x1xf32, #tpu.memory_space<vmem>>, vector<16x1xf32>
    %c0_9 = arith.constant 0 : index
    %c0_10 = arith.constant 0 : index
    %5 = vector.load %arg9[%c0_9, %c0_10] : memref<16x1xf32, #tpu.memory_space<vmem>>, vector<16x1xf32>
    %c15_i32 = arith.constant 15 : i32
    %6 = tpu.dynamic_rotate %3 by %c15_i32 dim 0 : vector<16x64xf32>, i32 -> vector<16x64xf32>
    %7 = vector.broadcast %5 : vector<16x1xf32> to vector<16x64xf32>
    %8 = arith.mulf %6, %7 : vector<16x64xf32>
    %9 = tpu.concatenate %3, %8 in 1 : vector<16x64xf32>, vector<16x64xf32> -> vector<16x128xf32>
    %cst = arith.constant dense<0.000000e+00> : vector<16x256xf32>
    %10 = tpu.matmul %9, %0, %cst {dimension_numbers = #tpu.dot_dimension_numbers<[1], [0], [0], [1], [0, 0, 1, 1], [], []>} : vector<16x128xf32>, vector<128x256xf32>, vector<16x256xf32> -> vector<16x256xf32>
    %c0_11 = arith.constant 0 : index
    %c0_12 = arith.constant 0 : index
    %11 = vector.load %arg5[%c0_11, %c0_12] : memref<1x256xf32, #tpu.memory_space<vmem>>, vector<1x256xf32>
    %12 = vector.broadcast %11 : vector<1x256xf32> to vector<16x256xf32>
    %13 = arith.addf %10, %12 : vector<16x256xf32>
    %cst_13 = arith.constant 0.000000e+00 : f32
    %14 = vector.broadcast %cst_13 : f32 to vector<16x256xf32>
    %15 = arith.cmpf ogt, %13, %14 : vector<16x256xf32>
    %cst_14 = arith.constant 2.000000e-01 : f32
    %16 = vector.broadcast %cst_14 : f32 to vector<16x256xf32>
    %17 = arith.mulf %16, %13 : vector<16x256xf32>
    %18 = arith.select %15, %13, %17 : vector<16x256xi1>, vector<16x256xf32>
    %19 = vector.extract_strided_slice %18 {offsets = [0, 0], sizes = [16, 128], strides = [1, 1]} : vector<16x256xf32> to vector<16x128xf32>
    %20 = vector.extract_strided_slice %18 {offsets = [0, 128], sizes = [16, 128], strides = [1, 1]} : vector<16x256xf32> to vector<16x128xf32>
    %c1_i32 = arith.constant 1 : i32
    %21 = tpu.dynamic_rotate %19 by %c1_i32 dim 0 : vector<16x128xf32>, i32 -> vector<16x128xf32>
    %22 = vector.broadcast %4 : vector<16x1xf32> to vector<16x128xf32>
    %23 = arith.mulf %21, %22 : vector<16x128xf32>
    %24 = tpu.concatenate %23, %20, %19 in 1 : vector<16x128xf32>, vector<16x128xf32>, vector<16x128xf32> -> vector<16x384xf32>
    %c15_i32_15 = arith.constant 15 : i32
    %25 = tpu.dynamic_rotate %20 by %c15_i32_15 dim 0 : vector<16x128xf32>, i32 -> vector<16x128xf32>
    %26 = vector.broadcast %5 : vector<16x1xf32> to vector<16x128xf32>
    %27 = arith.mulf %25, %26 : vector<16x128xf32>
    %28 = tpu.concatenate %20, %19, %27 in 1 : vector<16x128xf32>, vector<16x128xf32>, vector<16x128xf32> -> vector<16x384xf32>
    %29 = tpu.concatenate %24, %28 in 0 : vector<16x384xf32>, vector<16x384xf32> -> vector<32x384xf32>
    %cst_16 = arith.constant dense<0.000000e+00> : vector<32x128xf32>
    %30 = tpu.matmul %29, %1, %cst_16 {dimension_numbers = #tpu.dot_dimension_numbers<[1], [0], [0], [1], [0, 0, 1, 1], [], []>} : vector<32x384xf32>, vector<384x128xf32>, vector<32x128xf32> -> vector<32x128xf32>
    %c0_17 = arith.constant 0 : index
    %c0_18 = arith.constant 0 : index
    %31 = vector.load %arg6[%c0_17, %c0_18] : memref<1x128xf32, #tpu.memory_space<vmem>>, vector<1x128xf32>
    %32 = vector.broadcast %31 : vector<1x128xf32> to vector<32x128xf32>
    %33 = arith.addf %30, %32 : vector<32x128xf32>
    %cst_19 = arith.constant 0.000000e+00 : f32
    %34 = vector.broadcast %cst_19 : f32 to vector<32x128xf32>
    %35 = arith.cmpf ogt, %33, %34 : vector<32x128xf32>
    %cst_20 = arith.constant 2.000000e-01 : f32
    %36 = vector.broadcast %cst_20 : f32 to vector<32x128xf32>
    %37 = arith.mulf %36, %33 : vector<32x128xf32>
    %38 = arith.select %35, %33, %37 : vector<32x128xi1>, vector<32x128xf32>
    %39 = vector.extract_strided_slice %38 {offsets = [0, 0], sizes = [16, 128], strides = [1, 1]} : vector<32x128xf32> to vector<16x128xf32>
    %40 = arith.addf %39, %20 : vector<16x128xf32>
    %41 = vector.extract_strided_slice %38 {offsets = [16, 0], sizes = [16, 128], strides = [1, 1]} : vector<32x128xf32> to vector<16x128xf32>
    %42 = arith.addf %41, %19 : vector<16x128xf32>
    %c1_i32_21 = arith.constant 1 : i32
    %43 = tpu.dynamic_rotate %42 by %c1_i32_21 dim 0 : vector<16x128xf32>, i32 -> vector<16x128xf32>
    %44 = vector.broadcast %4 : vector<16x1xf32> to vector<16x128xf32>
    %45 = arith.mulf %43, %44 : vector<16x128xf32>
    %46 = tpu.concatenate %45, %40, %42 in 1 : vector<16x128xf32>, vector<16x128xf32>, vector<16x128xf32> -> vector<16x384xf32>
    %cst_22 = arith.constant dense<0.000000e+00> : vector<16x64xf32>
    %47 = tpu.matmul %46, %2, %cst_22 {dimension_numbers = #tpu.dot_dimension_numbers<[1], [0], [0], [1], [0, 0, 1, 1], [], []>} : vector<16x384xf32>, vector<384x64xf32>, vector<16x64xf32> -> vector<16x64xf32>
    %c0_23 = arith.constant 0 : index
    %c0_24 = arith.constant 0 : index
    %48 = vector.load %arg7[%c0_23, %c0_24] : memref<1x64xf32, #tpu.memory_space<vmem>>, vector<1x64xf32>
    %49 = vector.broadcast %48 : vector<1x64xf32> to vector<16x64xf32>
    %50 = arith.addf %47, %49 : vector<16x64xf32>
    %cst_25 = arith.constant 0.000000e+00 : f32
    %51 = vector.broadcast %cst_25 : f32 to vector<16x64xf32>
    %52 = arith.cmpf ogt, %50, %51 : vector<16x64xf32>
    %cst_26 = arith.constant 2.000000e-01 : f32
    %53 = vector.broadcast %cst_26 : f32 to vector<16x64xf32>
    %54 = arith.mulf %53, %50 : vector<16x64xf32>
    %55 = arith.select %52, %50, %54 : vector<16x64xi1>, vector<16x64xf32>
    %56 = arith.addf %55, %3 : vector<16x64xf32>
    %c0_27 = arith.constant 0 : index
    %c0_28 = arith.constant 0 : index
    %57 = vector.load %arg10[%c0_27, %c0_28] : memref<16x64xf32, #tpu.memory_space<vmem>>, vector<16x64xf32>
    tpu.vector_store %arg10[%c0_27, %c0_28], %56 {strides = array<i32>} : memref<16x64xf32, #tpu.memory_space<vmem>>, vector<16x64xf32>,
    return
  }
  func.func @transform_0(%arg0: i32) -> (i32, i32) {
    %c0_i32 = arith.constant 0 : i32
    %c0_i32_0 = arith.constant 0 : i32
    return %arg0, %c0_i32 : i32, i32
  }
  func.func @transform_1(%arg0: i32) -> (i32, i32) {
    %c0_i32 = arith.constant 0 : i32
    %c0_i32_0 = arith.constant 0 : i32
    %c0_i32_1 = arith.constant 0 : i32
    return %c0_i32, %c0_i32_0 : i32, i32
  }
  func.func @transform_2(%arg0: i32) -> (i32, i32) {
    %c0_i32 = arith.constant 0 : i32
    %c0_i32_0 = arith.constant 0 : i32
    %c0_i32_1 = arith.constant 0 : i32
    return %c0_i32, %c0_i32_0 : i32, i32
  }
  func.func @transform_3(%arg0: i32) -> (i32, i32) {
    %c0_i32 = arith.constant 0 : i32
    %c0_i32_0 = arith.constant 0 : i32
    %c0_i32_1 = arith.constant 0 : i32
    return %c0_i32, %c0_i32_0 : i32, i32
  }
  func.func @transform_4(%arg0: i32) -> (i32, i32) {
    %c0_i32 = arith.constant 0 : i32
    %c0_i32_0 = arith.constant 0 : i32
    %c0_i32_1 = arith.constant 0 : i32
    return %c0_i32, %c0_i32_0 : i32, i32
  }
  func.func @transform_5(%arg0: i32) -> (i32, i32) {
    %c0_i32 = arith.constant 0 : i32
    %c0_i32_0 = arith.constant 0 : i32
    %c0_i32_1 = arith.constant 0 : i32
    return %c0_i32, %c0_i32_0 : i32, i32
  }
  func.func @transform_6(%arg0: i32) -> (i32, i32) {
    %c0_i32 = arith.constant 0 : i32
    %c0_i32_0 = arith.constant 0 : i32
    %c0_i32_1 = arith.constant 0 : i32
    return %c0_i32, %c0_i32_0 : i32, i32
  }
  func.func @transform_7(%arg0: i32) -> (i32, i32) {
    %c0_i32 = arith.constant 0 : i32
    %c0_i32_0 = arith.constant 0 : i32
    %c0_i32_1 = arith.constant 0 : i32
    return %c0_i32, %c0_i32_0 : i32, i32
  }
  func.func @transform_8(%arg0: i32) -> (i32, i32) {
    %c0_i32 = arith.constant 0 : i32
    %c0_i32_0 = arith.constant 0 : i32
    %c0_i32_1 = arith.constant 0 : i32
    return %c0_i32, %c0_i32_0 : i32, i32
  }
  func.func @transform_9(%arg0: i32) -> (i32, i32) {
    %c0_i32 = arith.constant 0 : i32
    %c0_i32_0 = arith.constant 0 : i32
    return %arg0, %c0_i32 : i32, i32
  }
}

</mosaic_0001>

<llo_original>
// kernel: up_res_cnn_forward.1
$region0: #{up_res_cnn_forward.1}
  #allocation0 [shape = 'u32[]', space=smem, size = 0x4, offset = 0x4, fixed_abs, tag = 'smem constant byte address 0x4 - core index']
  #allocation1 [shape = 'u32[144,128]{1,0:T(1,128)}', space=vmem, size = 0x12000, scoped, tag = 'internal scratch']
  %s0 = inlined_call_operand.vmem [shape: f32[32,64], index: 0, kind: input, shape index: {}]
  %s1 = inlined_call_operand.vmem [shape: f32[128,256], index: 1, kind: input, shape index: {}]
  %s2 = inlined_call_operand.vmem [shape: f32[384,128], index: 2, kind: input, shape index: {}]
  %s3 = inlined_call_operand.vmem [shape: f32[384,64], index: 3, kind: input, shape index: {}]
  %s4 = inlined_call_operand.vmem [shape: f32[1,256], index: 4, kind: input, shape index: {}]
  %s5 = inlined_call_operand.vmem [shape: f32[1,128], index: 5, kind: input, shape index: {}]
  %s6 = inlined_call_operand.vmem [shape: f32[1,64], index: 6, kind: input, shape index: {}]
  %s7 = inlined_call_operand.vmem [shape: f32[16,1], index: 7, kind: input, shape index: {}]
  %s8 = inlined_call_operand.vmem [shape: f32[16,1], index: 8, kind: input, shape index: {}]
  %s9 = inlined_call_operand.vmem [shape: f32[32,64], index: 9, kind: output, shape index: {}]
  %s10 = sld [smem:[#allocation0]]
  $region69: #{up_res_cnn_forward.1} parent=0
    _
  %s12 = ssub.s32 1, %s10
  %s13 = scalar_select 0, %s12, %s10
  loop: start=0, step=1, limit=4
  $region2: #{up_res_cnn_forward.1} parent=0 // loop_pre_header
    _
  $region3: #{up_res_cnn_forward.1} parent=0 // loop_header
    %s15 = sphi 0, %s19
    %p16 = scmp.ge.s32.totalorder %s15, 4
    %s25 = sphi 0, %s27
    %s28 = sphi 0, %s25
    %s29 = sphi 0, %s28
    %s45 = sphi 0, %s29
    %s49 = sphi 0, %s49
    %s51 = sphi 0, %s49
    %s52 = sphi 0, %s51
    %s66 = sphi 0, %s52
    %s70 = sphi 0, %s70
    %s72 = sphi 0, %s70
    %s73 = sphi 0, %s72
    %s87 = sphi 0, %s73
    %s91 = sphi 0, %s91
    %s93 = sphi 0, %s91
    %s94 = sphi 0, %s93
    %s108 = sphi 0, %s94
    %s112 = sphi 0, %s112
    %s114 = sphi 0, %s112
    %s115 = sphi 0, %s114
    %s129 = sphi 0, %s115
    %s133 = sphi 0, %s133
    %s135 = sphi 0, %s133
    %s136 = sphi 0, %s135
    %s150 = sphi 0, %s136
    %s154 = sphi 0, %s154
    %s156 = sphi 0, %s154
    %s157 = sphi 0, %s156
    %s171 = sphi 0, %s157
    %s175 = sphi 0, %s175
    %s177 = sphi 0, %s175
    %s178 = sphi 0, %s177
    %s192 = sphi 0, %s178
    %s196 = sphi 0, %s196
    %s198 = sphi 0, %s196
    %s199 = sphi 0, %s198
    %s213 = sphi 0, %s199
    %s219 = sphi 0, %s221
    %s222 = sphi 0, %s219
    %s223 = sphi 0, %s222
    %s239 = sphi 0, %s223
  $region4: #{up_res_cnn_forward.1} parent=0 // loop_header_branch
    %18 = sbr.rel (%p16) target = $region8
  $region5: #{up_res_cnn_forward.1} parent=0 // loop_body
    %s20 = ssub.s32 %s15, 1
    %s21 = ssub.s32 %s15, 2
    %s22 = sadd.s32 %s15, 1
    %s23 = ssub.s32 %s15, %s22
    %p24 = scmp.eq.s32.totalorder %s23, 0
    %s26 = sadd.s32 %s25, 1
    %s27 = scalar_select %p24, %s25, %s26
    %p30 = pneg %p24
    %p31 = scmp.eq.s32.totalorder %s15, 1
    %p32 = por %p30, %p31
    %p33 = scmp.ne.s32.totalorder %s25, %s28
    %p34 = scmp.eq.s32.totalorder %s15, 0
    %p35 = por %p33, %p34
    %p36 = scmp.ne.s32.totalorder %s25, %s28
    %p37 = scmp.eq.s32.totalorder %s20, 1
    %p38 = por %p36, %p37
    %p39 = scmp.ne.s32.totalorder %s28, %s29
    %p40 = scmp.eq.s32.totalorder %s20, 0
    %p41 = por %p39, %p40
    %p42 = scmp.ne.s32.totalorder %s28, %s29
    %p43 = scmp.eq.s32.totalorder %s21, 1
    %p44 = por %p42, %p43
    %p46 = scmp.ne.s32.totalorder %s29, %s45
    %p47 = scmp.eq.s32.totalorder %s21, 0
    %p48 = por %p46, %p47
    %s50 = sadd.s32 %s49, 1
    %p53 = scmp.eq.s32.totalorder %s15, 1
    %p54 = scmp.ne.s32.totalorder %s49, %s51
    %p55 = scmp.eq.s32.totalorder %s15, 0
    %p56 = por %p54, %p55
    %p57 = scmp.ne.s32.totalorder %s49, %s51
    %p58 = scmp.eq.s32.totalorder %s20, 1
    %p59 = por %p57, %p58
    %p60 = scmp.ne.s32.totalorder %s51, %s52
    %p61 = scmp.eq.s32.totalorder %s20, 0
    %p62 = por %p60, %p61
    %p63 = scmp.ne.s32.totalorder %s51, %s52
    %p64 = scmp.eq.s32.totalorder %s21, 1
    %p65 = por %p63, %p64
    %p67 = scmp.ne.s32.totalorder %s52, %s66
    %p68 = scmp.eq.s32.totalorder %s21, 0
    %p69 = por %p67, %p68
    %s71 = sadd.s32 %s70, 1
    %p74 = scmp.eq.s32.totalorder %s15, 1
    %p75 = scmp.ne.s32.totalorder %s70, %s72
    %p76 = scmp.eq.s32.totalorder %s15, 0
    %p77 = por %p75, %p76
    %p78 = scmp.ne.s32.totalorder %s70, %s72
    %p79 = scmp.eq.s32.totalorder %s20, 1
    %p80 = por %p78, %p79
    %p81 = scmp.ne.s32.totalorder %s72, %s73
    %p82 = scmp.eq.s32.totalorder %s20, 0
    %p83 = por %p81, %p82
    %p84 = scmp.ne.s32.totalorder %s72, %s73
    %p85 = scmp.eq.s32.totalorder %s21, 1
    %p86 = por %p84, %p85
    %p88 = scmp.ne.s32.totalorder %s73, %s87
    %p89 = scmp.eq.s32.totalorder %s21, 0
    %p90 = por %p88, %p89
    %s92 = sadd.s32 %s91, 1
    %p95 = scmp.eq.s32.totalorder %s15, 1
    %p96 = scmp.ne.s32.totalorder %s91, %s93
    %p97 = scmp.eq.s32.totalorder %s15, 0
    %p98 = por %p96, %p97
    %p99 = scmp.ne.s32.totalorder %s91, %s93
    %p100 = scmp.eq.s32.totalorder %s20, 1
    %p101 = por %p99, %p100
    %p102 = scmp.ne.s32.totalorder %s93, %s94
    %p103 = scmp.eq.s32.totalorder %s20, 0
    %p104 = por %p102, %p103
    %p105 = scmp.ne.s32.totalorder %s93, %s94
    %p106 = scmp.eq.s32.totalorder %s21, 1
    %p107 = por %p105, %p106
    %p109 = scmp.ne.s32.totalorder %s94, %s108
    %p110 = scmp.eq.s32.totalorder %s21, 0
    %p111 = por %p109, %p110
    %s113 = sadd.s32 %s112, 1
    %p116 = scmp.eq.s32.totalorder %s15, 1
    %p117 = scmp.ne.s32.totalorder %s112, %s114
    %p118 = scmp.eq.s32.totalorder %s15, 0
    %p119 = por %p117, %p118
    %p120 = scmp.ne.s32.totalorder %s112, %s114
    %p121 = scmp.eq.s32.totalorder %s20, 1
    %p122 = por %p120, %p121
    %p123 = scmp.ne.s32.totalorder %s114, %s115
    %p124 = scmp.eq.s32.totalorder %s20, 0
    %p125 = por %p123, %p124
    %p126 = scmp.ne.s32.totalorder %s114, %s115
    %p127 = scmp.eq.s32.totalorder %s21, 1
    %p128 = por %p126, %p127
    %p130 = scmp.ne.s32.totalorder %s115, %s129
    %p131 = scmp.eq.s32.totalorder %s21, 0
    %p132 = por %p130, %p131
    %s134 = sadd.s32 %s133, 1
    %p137 = scmp.eq.s32.totalorder %s15, 1
    %p138 = scmp.ne.s32.totalorder %s133, %s135
    %p139 = scmp.eq.s32.totalorder %s15, 0
    %p140 = por %p138, %p139
    %p141 = scmp.ne.s32.totalorder %s133, %s135
    %p142 = scmp.eq.s32.totalorder %s20, 1
    %p143 = por %p141, %p142
    %p144 = scmp.ne.s32.totalorder %s135, %s136
    %p145 = scmp.eq.s32.totalorder %s20, 0
    %p146 = por %p144, %p145
    %p147 = scmp.ne.s32.totalorder %s135, %s136
    %p148 = scmp.eq.s32.totalorder %s21, 1
    %p149 = por %p147, %p148
    %p151 = scmp.ne.s32.totalorder %s136, %s150
    %p152 = scmp.eq.s32.totalorder %s21, 0
    %p153 = por %p151, %p152
    %s155 = sadd.s32 %s154, 1
    %p158 = scmp.eq.s32.totalorder %s15, 1
    %p159 = scmp.ne.s32.totalorder %s154, %s156
    %p160 = scmp.eq.s32.totalorder %s15, 0
    %p161 = por %p159, %p160
    %p162 = scmp.ne.s32.totalorder %s154, %s156
    %p163 = scmp.eq.s32.totalorder %s20, 1
    %p164 = por %p162, %p163
    %p165 = scmp.ne.s32.totalorder %s156, %s157
    %p166 = scmp.eq.s32.totalorder %s20, 0
    %p167 = por %p165, %p166
    %p168 = scmp.ne.s32.totalorder %s156, %s157
    %p169 = scmp.eq.s32.totalorder %s21, 1
    %p170 = por %p168, %p169
    %p172 = scmp.ne.s32.totalorder %s157, %s171
    %p173 = scmp.eq.s32.totalorder %s21, 0
    %p174 = por %p172, %p173
    %s176 = sadd.s32 %s175, 1
    %p179 = scmp.eq.s32.totalorder %s15, 1
    %p180 = scmp.ne.s32.totalorder %s175, %s177
    %p181 = scmp.eq.s32.totalorder %s15, 0
    %p182 = por %p180, %p181
    %p183 = scmp.ne.s32.totalorder %s175, %s177
    %p184 = scmp.eq.s32.totalorder %s20, 1
    %p185 = por %p183, %p184
    %p186 = scmp.ne.s32.totalorder %s177, %s178
    %p187 = scmp.eq.s32.totalorder %s20, 0
    %p188 = por %p186, %p187
    %p189 = scmp.ne.s32.totalorder %s177, %s178
    %p190 = scmp.eq.s32.totalorder %s21, 1
    %p191 = por %p189, %p190
    %p193 = scmp.ne.s32.totalorder %s178, %s192
    %p194 = scmp.eq.s32.totalorder %s21, 0
    %p195 = por %p193, %p194
    %s197 = sadd.s32 %s196, 1
    %p200 = scmp.eq.s32.totalorder %s15, 1
    %p201 = scmp.ne.s32.totalorder %s196, %s198
    %p202 = scmp.eq.s32.totalorder %s15, 0
    %p203 = por %p201, %p202
    %p204 = scmp.ne.s32.totalorder %s196, %s198
    %p205 = scmp.eq.s32.totalorder %s20, 1
    %p206 = por %p204, %p205
    %p207 = scmp.ne.s32.totalorder %s198, %s199
    %p208 = scmp.eq.s32.totalorder %s20, 0
    %p209 = por %p207, %p208
    %p210 = scmp.ne.s32.totalorder %s198, %s199
    %p211 = scmp.eq.s32.totalorder %s21, 1
    %p212 = por %p210, %p211
    %p214 = scmp.ne.s32.totalorder %s199, %s213
    %p215 = scmp.eq.s32.totalorder %s21, 0
    %p216 = por %p214, %p215
    %s217 = ssub.s32 %s15, %s22
    %p218 = scmp.eq.s32.totalorder %s217, 0
    %s220 = sadd.s32 %s219, 1
    %s221 = scalar_select %p218, %s219, %s220
    %p224 = pneg %p218
    %p225 = scmp.eq.s32.totalorder %s15, 1
    %p226 = por %p224, %p225
    %p227 = scmp.ne.s32.totalorder %s219, %s222
    %p228 = scmp.eq.s32.totalorder %s15, 0
    %p229 = por %p227, %p228
    %p230 = scmp.ne.s32.totalorder %s219, %s222
    %p231 = scmp.eq.s32.totalorder %s20, 1
    %p232 = por %p230, %p231
    %p233 = scmp.ne.s32.totalorder %s222, %s223
    %p234 = scmp.eq.s32.totalorder %s20, 0
    %p235 = por %p233, %p234
    %p236 = scmp.ne.s32.totalorder %s222, %s223
    %p237 = scmp.eq.s32.totalorder %s21, 1
    %p238 = por %p236, %p237
    %p240 = scmp.ne.s32.totalorder %s223, %s239
    %p241 = scmp.eq.s32.totalorder %s21, 0
    %p242 = por %p240, %p241
    %p243 = scmp.le.s32.totalorder 1, %s15
    %p244 = scmp.lt.s32.totalorder %s15, 3
    %p245 = pnand %p243, %p244
    %p246 = pneg %p245
    // Predicated region
    $region9: #{up_res_cnn_forward.1} parent=5 // pred_check
      _
    $region10: #{up_res_cnn_forward.1} parent=5 // pred_check_branch
      %248 = sbr.rel (%p245) target = $region12
    $region11: #{up_res_cnn_forward.1} parent=5 // pred_region
      %s249 = ssub.s32 %s15, 1
      // Predicated region
      $region13: #{up_res_cnn_forward.1} parent=11 // pred_check
        %p250 = pneg %p62
      $region14: #{up_res_cnn_forward.1} parent=11 // pred_check_branch
        %252 = sbr.rel (%p250) target = $region16
      $region15: #{up_res_cnn_forward.1} parent=11 // pred_region
        _
      $region16: #{up_res_cnn_forward.1} parent=11 // pred_fallthru
        _
      // Predicated region
      $region17: #{up_res_cnn_forward.1} parent=11 // pred_check
        %p253 = pneg %p83
      $region18: #{up_res_cnn_forward.1} parent=11 // pred_check_branch
        %255 = sbr.rel (%p253) target = $region20
      $region19: #{up_res_cnn_forward.1} parent=11 // pred_region
        _
      $region20: #{up_res_cnn_forward.1} parent=11 // pred_fallthru
        _
      // Predicated region
      $region21: #{up_res_cnn_forward.1} parent=11 // pred_check
        %p256 = pneg %p104
      $region22: #{up_res_cnn_forward.1} parent=11 // pred_check_branch
        %258 = sbr.rel (%p256) target = $region24
      $region23: #{up_res_cnn_forward.1} parent=11 // pred_region
        _
      $region24: #{up_res_cnn_forward.1} parent=11 // pred_fallthru
        _
      // Predicated region
      $region25: #{up_res_cnn_forward.1} parent=11 // pred_check
        %p259 = pneg %p125
      $region26: #{up_res_cnn_forward.1} parent=11 // pred_check_branch
        %261 = sbr.rel (%p259) target = $region28
      $region27: #{up_res_cnn_forward.1} parent=11 // pred_region
        _
      $region28: #{up_res_cnn_forward.1} parent=11 // pred_fallthru
        _
      // Predicated region
      $region29: #{up_res_cnn_forward.1} parent=11 // pred_check
        %p262 = pneg %p146
      $region30: #{up_res_cnn_forward.1} parent=11 // pred_check_branch
        %264 = sbr.rel (%p262) target = $region32
      $region31: #{up_res_cnn_forward.1} parent=11 // pred_region
        _
      $region32: #{up_res_cnn_forward.1} parent=11 // pred_fallthru
        _
      // Predicated region
      $region33: #{up_res_cnn_forward.1} parent=11 // pred_check
        %p265 = pneg %p167
      $region34: #{up_res_cnn_forward.1} parent=11 // pred_check_branch
        %267 = sbr.rel (%p265) target = $region36
      $region35: #{up_res_cnn_forward.1} parent=11 // pred_region
        _
      $region36: #{up_res_cnn_forward.1} parent=11 // pred_fallthru
        _
      // Predicated region
      $region37: #{up_res_cnn_forward.1} parent=11 // pred_check
        %p268 = pneg %p188
      $region38: #{up_res_cnn_forward.1} parent=11 // pred_check_branch
        %270 = sbr.rel (%p268) target = $region40
      $region39: #{up_res_cnn_forward.1} parent=11 // pred_region
        _
      $region40: #{up_res_cnn_forward.1} parent=11 // pred_fallthru
        _
      // Predicated region
      $region41: #{up_res_cnn_forward.1} parent=11 // pred_check
        %p271 = pneg %p209
      $region42: #{up_res_cnn_forward.1} parent=11 // pred_check_branch
        %273 = sbr.rel (%p271) target = $region44
      $region43: #{up_res_cnn_forward.1} parent=11 // pred_region
        _
      $region44: #{up_res_cnn_forward.1} parent=11 // pred_fallthru
        _
    $region12: #{up_res_cnn_forward.1} parent=5 // pred_fallthru
      _
    %p274 = scmp.lt.s32.totalorder %s15, 2
    // Predicated region
    $region45: #{up_res_cnn_forward.1} parent=5 // pred_check
      %p275 = pneg %p274
    $region46: #{up_res_cnn_forward.1} parent=5 // pred_check_branch
      %277 = sbr.rel (%p275) target = $region48
    $region47: #{up_res_cnn_forward.1} parent=5 // pred_region
      // Predicated region
      $region49: #{up_res_cnn_forward.1} parent=47 // pred_check
        %p278 = pneg %p35
      $region50: #{up_res_cnn_forward.1} parent=47 // pred_check_branch
        %280 = sbr.rel (%p278) target = $region52
      $region51: #{up_res_cnn_forward.1} parent=47 // pred_region
        %s281 = smul.u32 2, %s15
        %p282 = scmp.lt.s32.totalorder %s281, 3
        %s283 = scalar_select %p282, %s281, 3
        %s284 = smul.addr %s283, 8
        %s285 = scalar_lea.vmem %s0, %s284
        %s286 = smul.u32 2, %s15
      $region52: #{up_res_cnn_forward.1} parent=47 // pred_fallthru
        _
    $region48: #{up_res_cnn_forward.1} parent=5 // pred_fallthru
      _
    %p287 = scmp.le.s32.totalorder 1, %s15
    %p288 = scmp.lt.s32.totalorder %s15, 3
    %p289 = pnand %p287, %p288
    %p290 = pneg %p289
    // Predicated region
    $region53: #{up_res_cnn_forward.1} parent=5 // pred_check
      _
    $region54: #{up_res_cnn_forward.1} parent=5 // pred_check_branch
      %292 = sbr.rel (%p289) target = $region56
    $region55: #{up_res_cnn_forward.1} parent=5 // pred_region
      %s293 = ssub.s32 %s15, 1
      %s294 = smul.u32 2, %s20
      %p295 = scmp.lt.s32.totalorder %s294, 3
      %s296 = scalar_select %p295, %s294, 3
      %s297 = smul.addr %s296, 8
      %s298 = scalar_lea.vmem %s0, %s297
      %p299 = pneg %p41
      %p300 = pneg %p38
      %p301 = pneg %p62
      %p302 = pneg %p59
      %p303 = pneg %p83
      %p304 = pneg %p80
      %p305 = pneg %p104
      %p306 = pneg %p101
      %p307 = pneg %p125
      %p308 = pneg %p122
      %p309 = pneg %p146
      %p310 = pneg %p143
      %p311 = pneg %p167
      %p312 = pneg %p164
      %p313 = pneg %p188
      %p314 = pneg %p185
      %p315 = pneg %p209
      %p316 = pneg %p206
      %p317 = pneg %p235
      %p318 = pneg %p232
      %s319 = smul.u32 2, %s20
      %p320 = scmp.lt.s32.totalorder %s319, 3
      %s321 = scalar_select %p320, %s319, 3
      %s322 = smul.addr %s321, 8
      %s323 = scalar_lea.vmem %s9, %s322
      %s324 = smul.u32 2, %s20
      %p325 = scmp.lt.s32.totalorder %s324, 3
      %s326 = scalar_select %p325, %s324, 3
      %s327 = smul.addr %s326, 8
      %s328 = scalar_lea.vmem %s0, %s327
      %s329 = smul.u32 2, %s20
      %s330 = smul.u32 2, %s20
      %p331 = scmp.lt.s32.totalorder %s330, 3
      %s332 = scalar_select %p331, %s330, 3
      %s333 = smul.addr %s332, 8
      %s334 = scalar_lea.vmem %s9, %s333
      %s335 = smul.u32 2, %s20
      %v336 = vld [vmem:[%s1] sm:$0xff]
      %v337 = vld [vmem:[%s1 + $0x8] sm:$0xff]
      %v338 = vld [vmem:[%s1 + $0x10] sm:$0xff]
      %v339 = vld [vmem:[%s1 + $0x18] sm:$0xff]
      %v340 = vld [vmem:[%s1 + $0x20] sm:$0xff]
      %v341 = vld [vmem:[%s1 + $0x28] sm:$0xff]
      %v342 = vld [vmem:[%s1 + $0x30] sm:$0xff]
      %v343 = vld [vmem:[%s1 + $0x38] sm:$0xff]
      %v344 = vld [vmem:[%s1 + $0x40] sm:$0xff]
      %v345 = vld [vmem:[%s1 + $0x48] sm:$0xff]
      %v346 = vld [vmem:[%s1 + $0x50] sm:$0xff]
      %v347 = vld [vmem:[%s1 + $0x58] sm:$0xff]
      %v348 = vld [vmem:[%s1 + $0x60] sm:$0xff]
      %v349 = vld [vmem:[%s1 + $0x68] sm:$0xff]
      %v350 = vld [vmem:[%s1 + $0x70] sm:$0xff]
      %v351 = vld [vmem:[%s1 + $0x78] sm:$0xff]
      %v352 = vld [vmem:[%s1 + $0x80] sm:$0xff]
      %v353 = vld [vmem:[%s1 + $0x88] sm:$0xff]
      %v354 = vld [vmem:[%s1 + $0x90] sm:$0xff]
      %v355 = vld [vmem:[%s1 + $0x98] sm:$0xff]
      %v356 = vld [vmem:[%s1 + $0xa0] sm:$0xff]
      %v357 = vld [vmem:[%s1 + $0xa8] sm:$0xff]
      %v358 = vld [vmem:[%s1 + $0xb0] sm:$0xff]
      %v359 = vld [vmem:[%s1 + $0xb8] sm:$0xff]
      %v360 = vld [vmem:[%s1 + $0xc0] sm:$0xff]
      %v361 = vld [vmem:[%s1 + $0xc8] sm:$0xff]
      %v362 = vld [vmem:[%s1 + $0xd0] sm:$0xff]
      %v363 = vld [vmem:[%s1 + $0xd8] sm:$0xff]
      %v364 = vld [vmem:[%s1 + $0xe0] sm:$0xff]
      %v365 = vld [vmem:[%s1 + $0xe8] sm:$0xff]
      %v366 = vld [vmem:[%s1 + $0xf0] sm:$0xff]
      %v367 = vld [vmem:[%s1 + $0xf8] sm:$0xff]
      %v368 = vld [vmem:[%s2] sm:$0xff]
      %v369 = vld [vmem:[%s2 + $0x8] sm:$0xff]
      %v370 = vld [vmem:[%s2 + $0x10] sm:$0xff]
      %v371 = vld [vmem:[%s2 + $0x18] sm:$0xff]
      %v372 = vld [vmem:[%s2 + $0x20] sm:$0xff]
      %v373 = vld [vmem:[%s2 + $0x28] sm:$0xff]
      %v374 = vld [vmem:[%s2 + $0x30] sm:$0xff]
      %v375 = vld [vmem:[%s2 + $0x38] sm:$0xff]
      %v376 = vld [vmem:[%s2 + $0x40] sm:$0xff]
      %v377 = vld [vmem:[%s2 + $0x48] sm:$0xff]
      %v378 = vld [vmem:[%s2 + $0x50] sm:$0xff]
      %v379 = vld [vmem:[%s2 + $0x58] sm:$0xff]
      %v380 = vld [vmem:[%s2 + $0x60] sm:$0xff]
      %v381 = vld [vmem:[%s2 + $0x68] sm:$0xff]
      %v382 = vld [vmem:[%s2 + $0x70] sm:$0xff]
      %v383 = vld [vmem:[%s2 + $0x78] sm:$0xff]
      %v384 = vld [vmem:[%s2 + $0x80] sm:$0xff]
      %v385 = vld [vmem:[%s2 + $0x88] sm:$0xff]
      %v386 = vld [vmem:[%s2 + $0x90] sm:$0xff]
      %v387 = vld [vmem:[%s2 + $0x98] sm:$0xff]
      %v388 = vld [vmem:[%s2 + $0xa0] sm:$0xff]
      %v389 = vld [vmem:[%s2 + $0xa8] sm:$0xff]
      %v390 = vld [vmem:[%s2 + $0xb0] sm:$0xff]
      %v391 = vld [vmem:[%s2 + $0xb8] sm:$0xff]
      %v392 = vld [vmem:[%s2 + $0xc0] sm:$0xff]
      %v393 = vld [vmem:[%s2 + $0xc8] sm:$0xff]
      %v394 = vld [vmem:[%s2 + $0xd0] sm:$0xff]
      %v395 = vld [vmem:[%s2 + $0xd8] sm:$0xff]
      %v396 = vld [vmem:[%s2 + $0xe0] sm:$0xff]
      %v397 = vld [vmem:[%s2 + $0xe8] sm:$0xff]
      %v398 = vld [vmem:[%s2 + $0xf0] sm:$0xff]
      %v399 = vld [vmem:[%s2 + $0xf8] sm:$0xff]
      %v400 = vld [vmem:[%s2 + $0x100] sm:$0xff]
      %v401 = vld [vmem:[%s2 + $0x108] sm:$0xff]
      %v402 = vld [vmem:[%s2 + $0x110] sm:$0xff]
      %v403 = vld [vmem:[%s2 + $0x118] sm:$0xff]
      %v404 = vld [vmem:[%s2 + $0x120] sm:$0xff]
      %v405 = vld [vmem:[%s2 + $0x128] sm:$0xff]
      %v406 = vld [vmem:[%s2 + $0x130] sm:$0xff]
      %v407 = vld [vmem:[%s2 + $0x138] sm:$0xff]
      %v408 = vld [vmem:[%s2 + $0x140] sm:$0xff]
      %v409 = vld [vmem:[%s2 + $0x148] sm:$0xff]
      %v410 = vld [vmem:[%s2 + $0x150] sm:$0xff]
      %v411 = vld [vmem:[%s2 + $0x158] sm:$0xff]
      %v412 = vld [vmem:[%s2 + $0x160] sm:$0xff]
      %v413 = vld [vmem:[%s2 + $0x168] sm:$0xff]
      %v414 = vld [vmem:[%s2 + $0x170] sm:$0xff]
      %v415 = vld [vmem:[%s2 + $0x178] sm:$0xff]
      %v416 = vld [vmem:[%s3] sm:$0xff]
      %v417 = vld [vmem:[%s3 + $0x8] sm:$0xff]
      %v418 = vld [vmem:[%s3 + $0x10] sm:$0xff]
      %v419 = vld [vmem:[%s3 + $0x18] sm:$0xff]
      %v420 = vld [vmem:[%s3 + $0x20] sm:$0xff]
      %v421 = vld [vmem:[%s3 + $0x28] sm:$0xff]
      %v422 = vld [vmem:[%s3 + $0x30] sm:$0xff]
      %v423 = vld [vmem:[%s3 + $0x38] sm:$0xff]
      %v424 = vld [vmem:[%s3 + $0x40] sm:$0xff]
      %v425 = vld [vmem:[%s3 + $0x48] sm:$0xff]
      %v426 = vld [vmem:[%s3 + $0x50] sm:$0xff]
      %v427 = vld [vmem:[%s3 + $0x58] sm:$0xff]
      %v428 = vld [vmem:[%s3 + $0x60] sm:$0xff]
      %v429 = vld [vmem:[%s3 + $0x68] sm:$0xff]
      %v430 = vld [vmem:[%s3 + $0x70] sm:$0xff]
      %v431 = vld [vmem:[%s3 + $0x78] sm:$0xff]
      %v432 = vld [vmem:[%s3 + $0x80] sm:$0xff]
      %v433 = vld [vmem:[%s3 + $0x88] sm:$0xff]
      %v434 = vld [vmem:[%s3 + $0x90] sm:$0xff]
      %v435 = vld [vmem:[%s3 + $0x98] sm:$0xff]
      %v436 = vld [vmem:[%s3 + $0xa0] sm:$0xff]
      %v437 = vld [vmem:[%s3 + $0xa8] sm:$0xff]
      %v438 = vld [vmem:[%s3 + $0xb0] sm:$0xff]
      %v439 = vld [vmem:[%s3 + $0xb8] sm:$0xff]
      %v440 = vld [vmem:[%s3 + $0xc0] sm:$0xff]
      %v441 = vld [vmem:[%s3 + $0xc8] sm:$0xff]
      %v442 = vld [vmem:[%s3 + $0xd0] sm:$0xff]
      %v443 = vld [vmem:[%s3 + $0xd8] sm:$0xff]
      %v444 = vld [vmem:[%s3 + $0xe0] sm:$0xff]
      %v445 = vld [vmem:[%s3 + $0xe8] sm:$0xff]
      %v446 = vld [vmem:[%s3 + $0xf0] sm:$0xff]
      %v447 = vld [vmem:[%s3 + $0xf8] sm:$0xff]
      %v448 = vld [vmem:[%s3 + $0x100] sm:$0xff]
      %v449 = vld [vmem:[%s3 + $0x108] sm:$0xff]
      %v450 = vld [vmem:[%s3 + $0x110] sm:$0xff]
      %v451 = vld [vmem:[%s3 + $0x118] sm:$0xff]
      %v452 = vld [vmem:[%s3 + $0x120] sm:$0xff]
      %v453 = vld [vmem:[%s3 + $0x128] sm:$0xff]
      %v454 = vld [vmem:[%s3 + $0x130] sm:$0xff]
      %v455 = vld [vmem:[%s3 + $0x138] sm:$0xff]
      %v456 = vld [vmem:[%s3 + $0x140] sm:$0xff]
      %v457 = vld [vmem:[%s3 + $0x148] sm:$0xff]
      %v458 = vld [vmem:[%s3 + $0x150] sm:$0xff]
      %v459 = vld [vmem:[%s3 + $0x158] sm:$0xff]
      %v460 = vld [vmem:[%s3 + $0x160] sm:$0xff]
      %v461 = vld [vmem:[%s3 + $0x168] sm:$0xff]
      %v462 = vld [vmem:[%s3 + $0x170] sm:$0xff]
      %v463 = vld [vmem:[%s3 + $0x178] sm:$0xff]
      %v464 = vld [vmem:[%s328] sm:$0xff]
      %v465 = vld [vmem:[%s328 + $0x8] sm:$0xff]
      %v466 = vld [vmem:[%s7] sm:$0xff]
      %v467 = vld [vmem:[%s7 + $0x8] sm:$0xff]
      %v468 = vld [vmem:[%s8] sm:$0xff]
      %v469 = vld [vmem:[%s8 + $0x8] sm:$0xff]
      %v470 = vrot.slane %v464, 1
      %v471 = vrot.slane %v465, 1
      %v472 = vlaneseq
      %v473 = vshrl.u32 %v472, 7
      %vm474 = vcmp.lt.s32.totalorder %v473, 7
      %v475 = vsel %vm474, %v470, %v471
      %v476 = vsel %vm474, %v471, %v470
      %478 = vset.pattern.permute.xlu0 0
      %479 = vperm.xlu0 %478, %v468
      %v480 = vpop.permute.xlu0 %479
      %483 = vset.pattern.permute.xlu0 0
      %484 = vperm.xlu0 %483, %v469
      %v485 = vpop.permute.xlu0 %484
      %v487 = vmul.f32 %v475, %v480
      %v488 = vmul.f32 %v476, %v485
      %491 = vrot.lane.b32.xlu0 %v487, 64
      %v492 = vpop.permute.xlu0 %491
      %493 = vrot.lane.b32.xlu0 %v488, 64
      %v494 = vpop.permute.xlu0 %493
      %vm497 = vcmask 523264
      %v498 = vsel %vm497, %v464, %v492
      %v499 = vsel %vm497, %v465, %v494
      %v500 = vld [vmem:[%s4] sm:$0x3]
      %v502 = vlaneseq
      %v503 = vshrl.u32 %v502, 7
      %v504 = vsub.s32 0, %v503
      %v505 = vrot.slane %v500, %v504
      %v506 = vlaneseq
      %v507 = vshrl.u32 %v506, 7
      %v508 = vsub.s32 1, %v507
      %v509 = vrot.slane %v500, %v508
      %512 = vmatprep.subr.mxu0 %v337
      %513 = vmatpush1.msra.mxu0 %v336
      %514 = vmatprep.subr.mxu0 %v339
      %515 = vmatpush1.msra.mxu0 %v338
      %516 = vmatprep.subr.mxu0 %v341
      %517 = vmatpush1.msra.mxu0 %v340
      %518 = vmatprep.subr.mxu0 %v343
      %519 = vmatpush1.msra.mxu0 %v342
      %520 = vmatprep.subr.mxu0 %v345
      %521 = vmatpush1.msra.mxu0 %v344
      %522 = vmatprep.subr.mxu0 %v347
      %523 = vmatpush1.msra.mxu0 %v346
      %524 = vmatprep.subr.mxu0 %v349
      %525 = vmatpush1.msra.mxu0 %v348
      %526 = vmatprep.subr.mxu0 %v351
      %527 = vmatpush1.msra.mxu0 %v350
      %528 = vmatprep.subr.mxu0 %v353
      %529 = vmatpush1.msra.mxu0 %v352
      %530 = vmatprep.subr.mxu0 %v355
      %531 = vmatpush1.msra.mxu0 %v354
      %532 = vmatprep.subr.mxu0 %v357
      %533 = vmatpush1.msra.mxu0 %v356
      %534 = vmatprep.subr.mxu0 %v359
      %535 = vmatpush1.msra.mxu0 %v358
      %536 = vmatprep.subr.mxu0 %v361
      %537 = vmatpush1.msra.mxu0 %v360
      %538 = vmatprep.subr.mxu0 %v363
      %539 = vmatpush1.msra.mxu0 %v362
      %540 = vmatprep.subr.mxu0 %v365
      %541 = vmatpush1.msra.mxu0 %v364
      %542 = vmatprep.subr.mxu0 %v367
      %543 = vmatpush1.msra.mxu0 %v366
      %544 = vmatprep.subr.mxu0 0.0
      %545 = vmatpush1.msra.mxu0 0.0
      %546 = vmatprep.subr.mxu0 0.0
      %547 = vmatpush1.msra.mxu0 0.0
      %548 = vmatprep.subr.mxu0 0.0
      %549 = vmatpush1.msra.mxu0 0.0
      %550 = vmatprep.subr.mxu0 0.0
      %551 = vmatpush1.msra.mxu0 0.0
      %552 = vmatprep.subr.mxu0 0.0
      %553 = vmatpush1.msra.mxu0 0.0
      %554 = vmatprep.subr.mxu0 0.0
      %555 = vmatpush1.msra.mxu0 0.0
      %556 = vmatprep.subr.mxu0 0.0
      %557 = vmatpush1.msra.mxu0 0.0
      %558 = vmatprep.subr.mxu0 0.0
      %559 = vmatpush1.msra.mxu0 0.0
      %560 = vmatprep.subr.mxu0 0.0
      %561 = vmatpush1.msra.mxu0 0.0
      %562 = vmatprep.subr.mxu0 0.0
      %563 = vmatpush1.msra.mxu0 0.0
      %564 = vmatprep.subr.mxu0 0.0
      %565 = vmatpush1.msra.mxu0 0.0
      %566 = vmatprep.subr.mxu0 0.0
      %567 = vmatpush1.msra.mxu0 0.0
      %568 = vmatprep.subr.mxu0 0.0
      %569 = vmatpush1.msra.mxu0 0.0
      %570 = vmatprep.subr.mxu0 0.0
      %571 = vmatpush1.msra.mxu0 0.0
      %572 = vmatprep.subr.mxu0 0.0
      %573 = vmatpush1.msra.mxu0 0.0
      %574 = vmatprep.subr.mxu0 0.0
      %575 = vmatpush1.msra.mxu0 0.0
      %576 = vmatprep.mubr.f32.mxu0 0.0
      %577 = vmatmul.mubr.f32.gmra.mrb[0].mxu0 %v498
      %v578 = vpop.f32.mrb[0].mxu0
      %v579 = vadd.f32 %v505, %v578
      %v580 = vpop.f32.mrb[0].mxu0
      %v581 = vadd.f32 %v509, %v580
      %582 = vmatprep.mubr.f32.mxu0 0.0
      %583 = vmatmul.mubr.f32.gmra.mrb[0].mxu0 %v499
      %v584 = vpop.f32.mrb[0].mxu0
      %v585 = vadd.f32 %v505, %v584
      %v586 = vpop.f32.mrb[0].mxu0
      %v587 = vadd.f32 %v509, %v586
      %588 = vdwg.mxu0
      %vm589 = vcmp.gt.f32.partialorder %v579, 0.0
      %vm590 = vcmp.gt.f32.partialorder %v581, 0.0
      %vm591 = vcmp.gt.f32.partialorder %v585, 0.0
      %vm592 = vcmp.gt.f32.partialorder %v587, 0.0
      %v593 = vmul.f32 %v579, 0.2
      %v594 = vmul.f32 %v581, 0.2
      %v595 = vmul.f32 %v585, 0.2
      %v596 = vmul.f32 %v587, 0.2
      %v597 = vsel %vm589, %v579, %v593
      %v598 = vsel %vm590, %v581, %v594
      %v599 = vsel %vm591, %v585, %v595
      %v600 = vsel %vm592, %v587, %v596
      %v601 = vrot.slane %v597, 7
      %v602 = vrot.slane %v599, 7
      %vm603 = vcmp.lt.s32.totalorder %v473, 1
      %v604 = vsel %vm603, %v601, %v602
      %v605 = vsel %vm603, %v602, %v601
      %607 = vset.pattern.permute.xlu0 0
      %608 = vperm.xlu0 %607, %v466
      %v609 = vpop.permute.xlu0 %608
      %612 = vset.pattern.permute.xlu0 0
      %613 = vperm.xlu0 %612, %v467
      %v614 = vpop.permute.xlu0 %613
      %v616 = vmul.f32 %v605, %v609
      %v617 = vmul.f32 %v604, %v614
      %v618 = vrot.slane %v598, 1
      %v619 = vrot.slane %v600, 1
      %v620 = vsel %vm474, %v618, %v619
      %v621 = vsel %vm474, %v619, %v618
      %v622 = vmul.f32 %v620, %v480
      %v623 = vmul.f32 %v621, %v485
      %v624 = vld [vmem:[%s5] sm:$0x1]
      %v626 = vlaneseq
      %v627 = vshrl.u32 %v626, 7
      %v628 = vsub.s32 0, %v627
      %v629 = vrot.slane %v624, %v628
      %631 = vmatprep.subr.mxu0 0.0
      %632 = vmatpush1.msra.mxu0 %v368
      %633 = vmatprep.subr.mxu0 0.0
      %634 = vmatpush1.msra.mxu0 %v369
      %635 = vmatprep.subr.mxu0 0.0
      %636 = vmatpush1.msra.mxu0 %v370
      %637 = vmatprep.subr.mxu0 0.0
      %638 = vmatpush1.msra.mxu0 %v371
      %639 = vmatprep.subr.mxu0 0.0
      %640 = vmatpush1.msra.mxu0 %v372
      %641 = vmatprep.subr.mxu0 0.0
      %642 = vmatpush1.msra.mxu0 %v373
      %643 = vmatprep.subr.mxu0 0.0
      %644 = vmatpush1.msra.mxu0 %v374
      %645 = vmatprep.subr.mxu0 0.0
      %646 = vmatpush1.msra.mxu0 %v375
      %647 = vmatprep.subr.mxu0 0.0
      %648 = vmatpush1.msra.mxu0 %v376
      %649 = vmatprep.subr.mxu0 0.0
      %650 = vmatpush1.msra.mxu0 %v377
      %651 = vmatprep.subr.mxu0 0.0
      %652 = vmatpush1.msra.mxu0 %v378
      %653 = vmatprep.subr.mxu0 0.0
      %654 = vmatpush1.msra.mxu0 %v379
      %655 = vmatprep.subr.mxu0 0.0
      %656 = vmatpush1.msra.mxu0 %v380
      %657 = vmatprep.subr.mxu0 0.0
      %658 = vmatpush1.msra.mxu0 %v381
      %659 = vmatprep.subr.mxu0 0.0
      %660 = vmatpush1.msra.mxu0 %v382
      %661 = vmatprep.subr.mxu0 0.0
      %662 = vmatpush1.msra.mxu0 %v383
      %663 = vmatprep.subr.mxu0 0.0
      %664 = vmatpush1.msra.mxu0 %v384
      %665 = vmatprep.subr.mxu0 0.0
      %666 = vmatpush1.msra.mxu0 %v385
      %667 = vmatprep.subr.mxu0 0.0
      %668 = vmatpush1.msra.mxu0 %v386
      %669 = vmatprep.subr.mxu0 0.0
      %670 = vmatpush1.msra.mxu0 %v387
      %671 = vmatprep.subr.mxu0 0.0
      %672 = vmatpush1.msra.mxu0 %v388
      %673 = vmatprep.subr.mxu0 0.0
      %674 = vmatpush1.msra.mxu0 %v389
      %675 = vmatprep.subr.mxu0 0.0
      %676 = vmatpush1.msra.mxu0 %v390
      %677 = vmatprep.subr.mxu0 0.0
      %678 = vmatpush1.msra.mxu0 %v391
      %679 = vmatprep.subr.mxu0 0.0
      %680 = vmatpush1.msra.mxu0 %v392
      %681 = vmatprep.subr.mxu0 0.0
      %682 = vmatpush1.msra.mxu0 %v393
      %683 = vmatprep.subr.mxu0 0.0
      %684 = vmatpush1.msra.mxu0 %v394
      %685 = vmatprep.subr.mxu0 0.0
      %686 = vmatpush1.msra.mxu0 %v395
      %687 = vmatprep.subr.mxu0 0.0
      %688 = vmatpush1.msra.mxu0 %v396
      %689 = vmatprep.subr.mxu0 0.0
      %690 = vmatpush1.msra.mxu0 %v397
      %691 = vmatprep.subr.mxu0 0.0
      %692 = vmatpush1.msra.mxu0 %v398
      %693 = vmatprep.subr.mxu0 0.0
      %694 = vmatpush1.msra.mxu0 %v399
      %695 = vmatprep.mubr.f32.mxu0 %v598
      %696 = vmatmul.mubr.f32.gmra.mrb[0].mxu0 %v616
      %v697 = vpop.f32.mrb[0].mxu0
      %v698 = vadd.f32 %v629, %v697
      %v699 = vpop.f32.mrb[0].mxu0
      %700 = vmatprep.mubr.f32.mxu0 %v600
      %701 = vmatmul.mubr.f32.gmra.mrb[0].mxu0 %v617
      %v702 = vpop.f32.mrb[0].mxu0
      %v703 = vadd.f32 %v629, %v702
      %v704 = vpop.f32.mrb[0].mxu0
      %705 = vmatprep.mubr.f32.mxu0 %v597
      %706 = vmatmul.mubr.f32.gmra.mrb[0].mxu0 %v598
      %v707 = vpop.f32.mrb[0].mxu0
      %v708 = vadd.f32 %v629, %v707
      %v709 = vpop.f32.mrb[0].mxu0
      %710 = vmatprep.mubr.f32.mxu0 %v599
      %711 = vmatmul.mubr.f32.gmra.mrb[0].mxu0 %v600
      %v712 = vpop.f32.mrb[0].mxu0
      %v713 = vadd.f32 %v629, %v712
      %v714 = vpop.f32.mrb[0].mxu0
      %715 = vdwg.mxu0
      %716 = vmatprep.subr.mxu0 0.0
      %717 = vmatpush1.msra.mxu0 %v400
      %718 = vmatprep.subr.mxu0 0.0
      %719 = vmatpush1.msra.mxu0 %v401
      %720 = vmatprep.subr.mxu0 0.0
      %721 = vmatpush1.msra.mxu0 %v402
      %722 = vmatprep.subr.mxu0 0.0
      %723 = vmatpush1.msra.mxu0 %v403
      %724 = vmatprep.subr.mxu0 0.0
      %725 = vmatpush1.msra.mxu0 %v404
      %726 = vmatprep.subr.mxu0 0.0
      %727 = vmatpush1.msra.mxu0 %v405
      %728 = vmatprep.subr.mxu0 0.0
      %729 = vmatpush1.msra.mxu0 %v406
      %730 = vmatprep.subr.mxu0 0.0
      %731 = vmatpush1.msra.mxu0 %v407
      %732 = vmatprep.subr.mxu0 0.0
      %733 = vmatpush1.msra.mxu0 %v408
      %734 = vmatprep.subr.mxu0 0.0
      %735 = vmatpush1.msra.mxu0 %v409
      %736 = vmatprep.subr.mxu0 0.0
      %737 = vmatpush1.msra.mxu0 %v410
      %738 = vmatprep.subr.mxu0 0.0
      %739 = vmatpush1.msra.mxu0 %v411
      %740 = vmatprep.subr.mxu0 0.0
      %741 = vmatpush1.msra.mxu0 %v412
      %742 = vmatprep.subr.mxu0 0.0
      %743 = vmatpush1.msra.mxu0 %v413
      %744 = vmatprep.subr.mxu0 0.0
      %745 = vmatpush1.msra.mxu0 %v414
      %746 = vmatprep.subr.mxu0 0.0
      %747 = vmatpush1.msra.mxu0 %v415
      %748 = vmatprep.subr.mxu0 0.0
      %749 = vmatpush1.msra.mxu0 0.0
      %750 = vmatprep.subr.mxu0 0.0
      %751 = vmatpush1.msra.mxu0 0.0
      %752 = vmatprep.subr.mxu0 0.0
      %753 = vmatpush1.msra.mxu0 0.0
      %754 = vmatprep.subr.mxu0 0.0
      %755 = vmatpush1.msra.mxu0 0.0
      %756 = vmatprep.subr.mxu0 0.0
      %757 = vmatpush1.msra.mxu0 0.0
      %758 = vmatprep.subr.mxu0 0.0
      %759 = vmatpush1.msra.mxu0 0.0
      %760 = vmatprep.subr.mxu0 0.0
      %761 = vmatpush1.msra.mxu0 0.0
      %762 = vmatprep.subr.mxu0 0.0
      %763 = vmatpush1.msra.mxu0 0.0
      %764 = vmatprep.subr.mxu0 0.0
      %765 = vmatpush1.msra.mxu0 0.0
      %766 = vmatprep.subr.mxu0 0.0
      %767 = vmatpush1.msra.mxu0 0.0
      %768 = vmatprep.subr.mxu0 0.0
      %769 = vmatpush1.msra.mxu0 0.0
      %770 = vmatprep.subr.mxu0 0.0
      %771 = vmatpush1.msra.mxu0 0.0
      %772 = vmatprep.subr.mxu0 0.0
      %773 = vmatpush1.msra.mxu0 0.0
      %774 = vmatprep.subr.mxu0 0.0
      %775 = vmatpush1.msra.mxu0 0.0
      %776 = vmatprep.subr.mxu0 0.0
      %777 = vmatpush1.msra.mxu0 0.0
      %778 = vmatprep.subr.mxu0 0.0
      %779 = vmatpush1.msra.mxu0 0.0
      %780 = vmatprep.mubr.f32.mxu0 0.0
      %781 = vmatmul.mubr.f32.gmra.mrb[0].mxu0 %v597
      %v782 = vpop.f32.mrb[0].mxu0
      %v783 = vadd.f32 %v698, %v782
      %v784 = vpop.f32.mrb[0].mxu0
      %785 = vmatprep.mubr.f32.mxu0 0.0
      %786 = vmatmul.mubr.f32.gmra.mrb[0].mxu0 %v599
      %v787 = vpop.f32.mrb[0].mxu0
      %v788 = vadd.f32 %v703, %v787
      %v789 = vpop.f32.mrb[0].mxu0
      %790 = vmatprep.mubr.f32.mxu0 0.0
      %791 = vmatmul.mubr.f32.gmra.mrb[0].mxu0 %v622
      %v792 = vpop.f32.mrb[0].mxu0
      %v793 = vadd.f32 %v708, %v792
      %v794 = vpop.f32.mrb[0].mxu0
      %795 = vmatprep.mubr.f32.mxu0 0.0
      %796 = vmatmul.mubr.f32.gmra.mrb[0].mxu0 %v623
      %v797 = vpop.f32.mrb[0].mxu0
      %v798 = vadd.f32 %v713, %v797
      %v799 = vpop.f32.mrb[0].mxu0
      %800 = vdwg.mxu0
      %vm801 = vcmp.gt.f32.partialorder %v783, 0.0
      %vm802 = vcmp.gt.f32.partialorder %v788, 0.0
      %vm803 = vcmp.gt.f32.partialorder %v793, 0.0
      %vm804 = vcmp.gt.f32.partialorder %v798, 0.0
      %v805 = vmul.f32 %v783, 0.2
      %v806 = vmul.f32 %v788, 0.2
      %v807 = vmul.f32 %v793, 0.2
      %v808 = vmul.f32 %v798, 0.2
      %v809 = vsel %vm801, %v783, %v805
      %v810 = vsel %vm802, %v788, %v806
      %v811 = vsel %vm803, %v793, %v807
      %v812 = vsel %vm804, %v798, %v808
      %v813 = vadd.f32 %v809, %v598
      %v814 = vadd.f32 %v810, %v600
      %v815 = vadd.f32 %v811, %v597
      %v816 = vadd.f32 %v812, %v599
      %v817 = vrot.slane %v815, 7
      %v818 = vrot.slane %v816, 7
      %v819 = vsel %vm603, %v817, %v818
      %v820 = vsel %vm603, %v818, %v817
      %v821 = vmul.f32 %v820, %v609
      %v822 = vmul.f32 %v819, %v614
      %v823 = vld [vmem:[%s6] sm:$0x1]
      %v825 = vlaneseq
      %v826 = vshrl.u32 %v825, 7
      %v827 = vsub.s32 0, %v826
      %v828 = vrot.slane %v823, %v827
      %830 = vmatprep.subr.mxu0 0.0
      %831 = vmatpush1.msra.mxu0 %v416
      %832 = vmatprep.subr.mxu0 0.0
      %833 = vmatpush1.msra.mxu0 %v417
      %834 = vmatprep.subr.mxu0 0.0
      %835 = vmatpush1.msra.mxu0 %v418
      %836 = vmatprep.subr.mxu0 0.0
      %837 = vmatpush1.msra.mxu0 %v419
      %838 = vmatprep.subr.mxu0 0.0
      %839 = vmatpush1.msra.mxu0 %v420
      %840 = vmatprep.subr.mxu0 0.0
      %841 = vmatpush1.msra.mxu0 %v421
      %842 = vmatprep.subr.mxu0 0.0
      %843 = vmatpush1.msra.mxu0 %v422
      %844 = vmatprep.subr.mxu0 0.0
      %845 = vmatpush1.msra.mxu0 %v423
      %846 = vmatprep.subr.mxu0 0.0
      %847 = vmatpush1.msra.mxu0 %v424
      %848 = vmatprep.subr.mxu0 0.0
      %849 = vmatpush1.msra.mxu0 %v425
      %850 = vmatprep.subr.mxu0 0.0
      %851 = vmatpush1.msra.mxu0 %v426
      %852 = vmatprep.subr.mxu0 0.0
      %853 = vmatpush1.msra.mxu0 %v427
      %854 = vmatprep.subr.mxu0 0.0
      %855 = vmatpush1.msra.mxu0 %v428
      %856 = vmatprep.subr.mxu0 0.0
      %857 = vmatpush1.msra.mxu0 %v429
      %858 = vmatprep.subr.mxu0 0.0
      %859 = vmatpush1.msra.mxu0 %v430
      %860 = vmatprep.subr.mxu0 0.0
      %861 = vmatpush1.msra.mxu0 %v431
      %862 = vmatprep.subr.mxu0 0.0
      %863 = vmatpush1.msra.mxu0 %v432
      %864 = vmatprep.subr.mxu0 0.0
      %865 = vmatpush1.msra.mxu0 %v433
      %866 = vmatprep.subr.mxu0 0.0
      %867 = vmatpush1.msra.mxu0 %v434
      %868 = vmatprep.subr.mxu0 0.0
      %869 = vmatpush1.msra.mxu0 %v435
      %870 = vmatprep.subr.mxu0 0.0
      %871 = vmatpush1.msra.mxu0 %v436
      %872 = vmatprep.subr.mxu0 0.0
      %873 = vmatpush1.msra.mxu0 %v437
      %874 = vmatprep.subr.mxu0 0.0
      %875 = vmatpush1.msra.mxu0 %v438
      %876 = vmatprep.subr.mxu0 0.0
      %877 = vmatpush1.msra.mxu0 %v439
      %878 = vmatprep.subr.mxu0 0.0
      %879 = vmatpush1.msra.mxu0 %v440
      %880 = vmatprep.subr.mxu0 0.0
      %881 = vmatpush1.msra.mxu0 %v441
      %882 = vmatprep.subr.mxu0 0.0
      %883 = vmatpush1.msra.mxu0 %v442
      %884 = vmatprep.subr.mxu0 0.0
      %885 = vmatpush1.msra.mxu0 %v443
      %886 = vmatprep.subr.mxu0 0.0
      %887 = vmatpush1.msra.mxu0 %v444
      %888 = vmatprep.subr.mxu0 0.0
      %889 = vmatpush1.msra.mxu0 %v445
      %890 = vmatprep.subr.mxu0 0.0
      %891 = vmatpush1.msra.mxu0 %v446
      %892 = vmatprep.subr.mxu0 0.0
      %893 = vmatpush1.msra.mxu0 %v447
      %894 = vmatprep.mubr.f32.mxu0 %v813
      %895 = vmatmul.mubr.f32.gmra.mrb[0].mxu0 %v821
      %v896 = vpop.f32.mrb[0].mxu0
      %v897 = vadd.f32 %v828, %v896
      %v898 = vpop.f32.mrb[0].mxu0
      %899 = vmatprep.mubr.f32.mxu0 %v814
      %900 = vmatmul.mubr.f32.gmra.mrb[0].mxu0 %v822
      %v901 = vpop.f32.mrb[0].mxu0
      %v902 = vadd.f32 %v828, %v901
      %v903 = vpop.f32.mrb[0].mxu0
      %904 = vdwg.mxu0
      %905 = vmatprep.subr.mxu0 0.0
      %906 = vmatpush1.msra.mxu0 %v448
      %907 = vmatprep.subr.mxu0 0.0
      %908 = vmatpush1.msra.mxu0 %v449
      %909 = vmatprep.subr.mxu0 0.0
      %910 = vmatpush1.msra.mxu0 %v450
      %911 = vmatprep.subr.mxu0 0.0
      %912 = vmatpush1.msra.mxu0 %v451
      %913 = vmatprep.subr.mxu0 0.0
      %914 = vmatpush1.msra.mxu0 %v452
      %915 = vmatprep.subr.mxu0 0.0
      %916 = vmatpush1.msra.mxu0 %v453
      %917 = vmatprep.subr.mxu0 0.0
      %918 = vmatpush1.msra.mxu0 %v454
      %919 = vmatprep.subr.mxu0 0.0
      %920 = vmatpush1.msra.mxu0 %v455
      %921 = vmatprep.subr.mxu0 0.0
      %922 = vmatpush1.msra.mxu0 %v456
      %923 = vmatprep.subr.mxu0 0.0
      %924 = vmatpush1.msra.mxu0 %v457
      %925 = vmatprep.subr.mxu0 0.0
      %926 = vmatpush1.msra.mxu0 %v458
      %927 = vmatprep.subr.mxu0 0.0
      %928 = vmatpush1.msra.mxu0 %v459
      %929 = vmatprep.subr.mxu0 0.0
      %930 = vmatpush1.msra.mxu0 %v460
      %931 = vmatprep.subr.mxu0 0.0
      %932 = vmatpush1.msra.mxu0 %v461
      %933 = vmatprep.subr.mxu0 0.0
      %934 = vmatpush1.msra.mxu0 %v462
      %935 = vmatprep.subr.mxu0 0.0
      %936 = vmatpush1.msra.mxu0 %v463
      %937 = vmatprep.subr.mxu0 0.0
      %938 = vmatpush1.msra.mxu0 0.0
      %939 = vmatprep.subr.mxu0 0.0
      %940 = vmatpush1.msra.mxu0 0.0
      %941 = vmatprep.subr.mxu0 0.0
      %942 = vmatpush1.msra.mxu0 0.0
      %943 = vmatprep.subr.mxu0 0.0
      %944 = vmatpush1.msra.mxu0 0.0
      %945 = vmatprep.subr.mxu0 0.0
      %946 = vmatpush1.msra.mxu0 0.0
      %947 = vmatprep.subr.mxu0 0.0
      %948 = vmatpush1.msra.mxu0 0.0
      %949 = vmatprep.subr.mxu0 0.0
      %950 = vmatpush1.msra.mxu0 0.0
      %951 = vmatprep.subr.mxu0 0.0
      %952 = vmatpush1.msra.mxu0 0.0
      %953 = vmatprep.subr.mxu0 0.0
      %954 = vmatpush1.msra.mxu0 0.0
      %955 = vmatprep.subr.mxu0 0.0
      %956 = vmatpush1.msra.mxu0 0.0
      %957 = vmatprep.subr.mxu0 0.0
      %958 = vmatpush1.msra.mxu0 0.0
      %959 = vmatprep.subr.mxu0 0.0
      %960 = vmatpush1.msra.mxu0 0.0
      %961 = vmatprep.subr.mxu0 0.0
      %962 = vmatpush1.msra.mxu0 0.0
      %963 = vmatprep.subr.mxu0 0.0
      %964 = vmatpush1.msra.mxu0 0.0
      %965 = vmatprep.subr.mxu0 0.0
      %966 = vmatpush1.msra.mxu0 0.0
      %967 = vmatprep.subr.mxu0 0.0
      %968 = vmatpush1.msra.mxu0 0.0
      %969 = vmatprep.mubr.f32.mxu0 0.0
      %970 = vmatmul.mubr.f32.gmra.mrb[0].mxu0 %v815
      %v971 = vpop.f32.mrb[0].mxu0
      %v972 = vadd.f32 %v897, %v971
      %v973 = vpop.f32.mrb[0].mxu0
      %974 = vmatprep.mubr.f32.mxu0 0.0
      %975 = vmatmul.mubr.f32.gmra.mrb[0].mxu0 %v816
      %v976 = vpop.f32.mrb[0].mxu0
      %v977 = vadd.f32 %v902, %v976
      %v978 = vpop.f32.mrb[0].mxu0
      %979 = vdwg.mxu0
      %vm980 = vcmp.gt.f32.partialorder %v972, 0.0
      %vm981 = vcmp.gt.f32.partialorder %v977, 0.0
      %v982 = vmul.f32 %v972, 0.2
      %v983 = vmul.f32 %v977, 0.2
      %v984 = vsel %vm980, %v972, %v982
      %v985 = vsel %vm981, %v977, %v983
      %v986 = vadd.f32 %v984, %v464
      %v987 = vadd.f32 %v985, %v465
      %988 = vst.msk [vmem:[%s334] sm:$0xff] %vm497, %v986
      %989 = vst.msk [vmem:[%s334 + $0x8] sm:$0xff] %vm497, %v987
      %s990 = smul.u32 2, %s20
      %p991 = scmp.lt.s32.totalorder %s990, 3
      %s992 = scalar_select %p991, %s990, 3
      %s993 = smul.addr %s992, 8
      %s994 = scalar_lea.vmem %s9, %s993
      // Predicated region
      $region57: #{up_res_cnn_forward.1} parent=55 // pred_check
        %p995 = pneg %p232
      $region58: #{up_res_cnn_forward.1} parent=55 // pred_check_branch
        %997 = sbr.rel (%p995) target = $region60
      $region59: #{up_res_cnn_forward.1} parent=55 // pred_region
        %s998 = smul.u32 2, %s20
      $region60: #{up_res_cnn_forward.1} parent=55 // pred_fallthru
        _
    $region56: #{up_res_cnn_forward.1} parent=5 // pred_fallthru
      _
    %p999 = scmp.le.s32.totalorder 2, %s15
    // Predicated region
    $region61: #{up_res_cnn_forward.1} parent=5 // pred_check
      %p1000 = pneg %p999
    $region62: #{up_res_cnn_forward.1} parent=5 // pred_check_branch
      %1002 = sbr.rel (%p1000) target = $region64
    $region63: #{up_res_cnn_forward.1} parent=5 // pred_region
      %s1003 = ssub.s32 %s15, 2
      // Predicated region
      $region65: #{up_res_cnn_forward.1} parent=63 // pred_check
        %p1004 = pneg %p238
      $region66: #{up_res_cnn_forward.1} parent=63 // pred_check_branch
        %1006 = sbr.rel (%p1004) target = $region68
      $region67: #{up_res_cnn_forward.1} parent=63 // pred_region
        %s1007 = smul.u32 2, %s21
        %p1008 = scmp.lt.s32.totalorder %s1007, 3
        %s1009 = scalar_select %p1008, %s1007, 3
        %s1010 = smul.addr %s1009, 8
        %s1011 = scalar_lea.vmem %s9, %s1010
      $region68: #{up_res_cnn_forward.1} parent=63 // pred_fallthru
        _
    $region64: #{up_res_cnn_forward.1} parent=5 // pred_fallthru
      _
  $region6: #{up_res_cnn_forward.1} parent=0 // loop_footer
    %s19 = sadd.s32 1, %s15
  $region7: #{up_res_cnn_forward.1} parent=0 // loop_footer_branch
    %14 = sbr.rel target = $region3
  $region8: #{up_res_cnn_forward.1} parent=0 // loop_exit
    _

</llo_original>
